<compile_context>
chip_gen: v7x
topology: tpu7x:2x2x1
jax: 0.10.0
libtpu: 0.0.40
codegen_flags: <defaults>
</compile_context>

<pallas_src>
import jax
import jax.numpy as jnp
from jax.experimental import pallas as pl
from jax.experimental.pallas import tpu as pltpu


# ---------------------------------------------------------------------------
# Parameter setup (matches PositionalEncoding.__init__) — done once.
# ---------------------------------------------------------------------------
def make_pos_table(max_len: int, d_model: int, dtype=jnp.float32) -> jnp.ndarray:
    """Build the (1, max_len, d_model) sinusoidal table, same math as PyTorch.

    dtype=jnp.float32 reproduces the PyTorch buffer exactly; pass bf16 for the
    bandwidth-saving fast path (sinusoids tolerate bf16)."""
    temp = (
        jnp.arange(max_len, dtype=jnp.float32).reshape(-1, 1)
        / jnp.power(
            jnp.float32(10000.0),
            jnp.arange(0, d_model, 2, dtype=jnp.float32) / jnp.float32(d_model),
        )
    )
    pos = jnp.zeros((1, max_len, d_model), dtype=jnp.float32)
    pos = pos.at[:, :, 0::2].set(jnp.sin(temp))
    pos = pos.at[:, :, 1::2].set(jnp.cos(temp))
    return pos.astype(dtype)


# ---------------------------------------------------------------------------
# Pallas kernel: rank-matched elementwise add (pure vld + vadd + vst per vreg).
# pos block broadcasts over the batch (sublane / leading) dim of the x block.
# ---------------------------------------------------------------------------
def _add_pos_kernel(x_ref, pos_ref, o_ref):
    o_ref[...] = (x_ref[...] + pos_ref[...]).astype(o_ref.dtype)


# ---------------------------------------------------------------------------
# Tiling helpers.
# ---------------------------------------------------------------------------
def _round_up(v: int, q: int) -> int:
    return ((v + q - 1) // q) * q


def _round_down_pos(v: int, q: int) -> int:
    return max(q, (v // q) * q)


def _sublane_quantum(*dtypes) -> int:
    """Dtype-aware sublane quantum: 8 for 32-bit, 16 for bf16, 32 for 8-bit."""
    q = 8
    for dt in dtypes:
        isz = jnp.dtype(dt).itemsize
        if isz < 4:
            q = max(q, 8 * (4 // isz))
    return q


def _generation_budgets():
    """(per-buffer tile byte budget, vmem_limit_bytes), tuned per TPU generation."""
    vmem_cap = 128 * 1024 * 1024
    try:
        info = pltpu.get_tpu_info()
        cap = getattr(info, "vmem_capacity_bytes", None)
        if cap:
            vmem_cap = int(cap)
    except Exception:
        pass
    if vmem_cap <= 64 * 1024 * 1024:
        # v7x-class: 64 MiB per TensorCore -> 4 MiB tiles keep 2x(x+pos+out)
        # double-buffering well inside VMEM while per-step overhead stays <10%.
        return 4 * 1024 * 1024, 32 * 1024 * 1024
    # v5e / v6e: 128 MiB physical VMEM -> 8 MiB tiles amortize the ~0.35us
    # per-step overhead (85%+ of HBM roofline), 64 MiB scoped limit.
    return 8 * 1024 * 1024, 64 * 1024 * 1024


# ---------------------------------------------------------------------------
# Forward: x (B, T, D), pos_table (1, max_len, D) -> (B, T, D) in promoted dtype
# ---------------------------------------------------------------------------
def positional_encoding_forward(x: jnp.ndarray, pos_table: jnp.ndarray) -> jnp.ndarray:
    B, T, D = x.shape
    _, max_len, d_model = pos_table.shape
    assert T <= max_len, "sequence length must be <= max_len"
    assert D == d_model

    out_dtype = jnp.promote_types(x.dtype, pos_table.dtype)
    max_itemsize = max(
        jnp.dtype(x.dtype).itemsize,
        jnp.dtype(pos_table.dtype).itemsize,
        jnp.dtype(out_dtype).itemsize,
    )
    sub_q = _sublane_quantum(x.dtype, pos_table.dtype, out_dtype)
    tile_bytes, vmem_limit = _generation_budgets()

    # pos is fetched once per seq-block (DMA elided across the inner batch axis),
    # so it contributes ~T*D bytes total.
    flops = B * T * D
    bytes_accessed = (
        B * T * D * jnp.dtype(x.dtype).itemsize        # read x
        + B * T * D * jnp.dtype(out_dtype).itemsize    # write out
        + T * D * jnp.dtype(pos_table.dtype).itemsize  # read pos once
    )
    cost = pl.CostEstimate(flops=flops, transcendentals=0, bytes_accessed=bytes_accessed)
    # Outer (seq/L-block) axis "parallel" -> shardable across v7x's 2 TCs;
    # inner batch axis "arbitrary" -> sequential per core, preserving pos DMA-skip.
    cparams = pltpu.CompilerParams(
        dimension_semantics=("parallel", "arbitrary"),
        vmem_limit_bytes=vmem_limit,
    )
    # NOTE: input_output_aliases={0: 0} could reuse x's HBM buffer when
    # out_dtype == x.dtype and the caller does not reuse x; left off by default.

    if D >= 128 and D % 128 == 0:
        # ---- 3-D path: D already lane-dense; tile seq (quantum-aligned) + batch. ----
        row_bytes = D * max_itemsize
        max_rows = _round_down_pos(max(1, tile_bytes // row_bytes), sub_q)
        tT = min(max_rows, _round_up(T, sub_q))          # multiple of sub_q (>= 8)
        tB = max(1, min(B, tile_bytes // (tT * row_bytes)))  # leading dim: no constraint

        return pl.pallas_call(
            _add_pos_kernel,
            out_shape=jax.ShapeDtypeStruct((B, T, D), out_dtype),
            grid=(pl.cdiv(T, tT), pl.cdiv(B, tB)),       # batch-block axis innermost
            in_specs=[
                pl.BlockSpec((tB, tT, D), lambda t, b: (b, t, 0)),
                pl.BlockSpec((1, tT, D), lambda t, b: (0, t, 0)),   # constant across b
            ],
            out_specs=pl.BlockSpec((tB, tT, D), lambda t, b: (b, t, 0)),
            compiler_params=cparams,
            cost_estimate=cost,
        )(x, pos_table)

    # ---- Flattened path (d_model < 128 or not lane-aligned): (B, T*D) layout. ----
    L = T * D
    x_flat = x.reshape(B, L)                              # contiguous reshape (free)
    pos_flat = pos_table[0, :T, :].reshape(1, L)          # tiny setup slice

    # Lane tile first (prefer covering all of L), then grow the sublane (batch)
    # tile until the per-buffer tile fills the byte budget.
    lane_budget = _round_down_pos(max(128, tile_bytes // (sub_q * max_itemsize)), 128)
    tL = min(lane_budget, _round_up(L, 128))              # multiple of 128
    row_budget = _round_down_pos(max(sub_q, tile_bytes // (tL * max_itemsize)), sub_q)
    tB = min(row_budget, _round_up(B, sub_q))             # multiple of sub_q

    out_flat = pl.pallas_call(
        _add_pos_kernel,
        out_shape=jax.ShapeDtypeStruct((B, L), out_dtype),
        grid=(pl.cdiv(L, tL), pl.cdiv(B, tB)),            # batch-block axis innermost
        in_specs=[
            pl.BlockSpec((tB, tL), lambda j, i: (i, j)),
            pl.BlockSpec((1, tL), lambda j, i: (0, j)),   # constant across i -> DMA elided
        ],
        out_specs=pl.BlockSpec((tB, tL), lambda j, i: (i, j)),
        compiler_params=cparams,
        cost_estimate=cost,
    )(x_flat, pos_flat)
    return out_flat.reshape(B, T, D)


# ---------------------------------------------------------------------------
# Demo / self-check
# ---------------------------------------------------------------------------
if __name__ == "__main__":
    MAX_LEN = 16
    B = 2
    key = jax.random.PRNGKey(0)

    # Path 1: d_model < 128 (flattened, lane-dense), f32 — matches the module's toy config.
    T, D_MODEL = 8, 32
    pos_table = make_pos_table(MAX_LEN, D_MODEL)
    x = jax.random.normal(key, (B, T, D_MODEL), dtype=jnp.float32)
    out = jax.block_until_ready(positional_encoding_forward(x, pos_table))
    ref = x + pos_table[:, :T, :]
    assert out.shape == ref.shape and out.dtype == ref.dtype
    assert jnp.allclose(out, ref, atol=1e-6, rtol=1e-6)

    # Path 2: d_model multiple of 128 (3-D path, full table windowed by BlockSpec).
    T2, D_MODEL2 = 8, 128
    pos_table2 = make_pos_table(MAX_LEN, D_MODEL2)
    x2 = jax.random.normal(jax.random.PRNGKey(0), (B, T2, D_MODEL2), dtype=jnp.float32)
    out2 = jax.block_until_ready(positional_encoding_forward(x2, pos_table2))
    ref2 = x2 + pos_table2[:, :T2, :]
    assert out2.shape == ref2.shape and out2.dtype == ref2.dtype
    assert jnp.allclose(out2, ref2, atol=1e-6, rtol=1e-6)

    # Path 3: awkward T (masked tail blocks) + bf16 fast path (bf16 table & output).
    T3, D_MODEL3 = 7, 32
    pos_table3 = make_pos_table(MAX_LEN, D_MODEL3, dtype=jnp.bfloat16)
    x3 = jax.random.normal(jax.random.PRNGKey(0), (B, T3, D_MODEL3), dtype=jnp.bfloat16)
    out3 = jax.block_until_ready(positional_encoding_forward(x3, pos_table3))
    assert out3.shape == (B, T3, D_MODEL3) and out3.dtype == jnp.bfloat16
    ref3 = (x3.astype(jnp.float32) + pos_table3[:, :T3, :].astype(jnp.float32))
    assert jnp.allclose(out3.astype(jnp.float32), ref3, atol=2e-2, rtol=2e-2)

    print("KERNEL_OK")
</pallas_src>

<mosaic_0001>
module attributes {stable_mosaic.version = 11 : i64} {
  func.func @_add_pos_kernel(%arg0: i32, %arg1: i32, %arg2: memref<8x256xf32, #tpu.memory_space<vmem>>, %arg3: memref<1x256xf32, #tpu.memory_space<vmem>>, %arg4: memref<8x256xf32, #tpu.memory_space<vmem>>) attributes {dimension_semantics = [#tpu.dimension_semantics<parallel>, #tpu.dimension_semantics<arbitrary>], iteration_bounds = array<i64: 1, 1>, scalar_prefetch = 0 : i64, scratch_operands = 0 : i64, tpu.core_type = #tpu.core_type<tc>, window_params = [{transform_indices = @transform_0, window_bounds = array<i64: 8, 256>}, {transform_indices = @transform_1, window_bounds = array<i64: 1, 256>}, {transform_indices = @transform_2, window_bounds = array<i64: 8, 256>}]} {
    %c0 = arith.constant 0 : index
    %c0_0 = arith.constant 0 : index
    %0 = vector.load %arg2[%c0, %c0_0] : memref<8x256xf32, #tpu.memory_space<vmem>>, vector<8x256xf32>
    %c0_1 = arith.constant 0 : index
    %c0_2 = arith.constant 0 : index
    %1 = vector.load %arg3[%c0_1, %c0_2] : memref<1x256xf32, #tpu.memory_space<vmem>>, vector<1x256xf32>
    %2 = vector.broadcast %1 : vector<1x256xf32> to vector<8x256xf32>
    %3 = arith.addf %0, %2 : vector<8x256xf32>
    %c0_3 = arith.constant 0 : index
    %c0_4 = arith.constant 0 : index
    %4 = vector.load %arg4[%c0_3, %c0_4] : memref<8x256xf32, #tpu.memory_space<vmem>>, vector<8x256xf32>
    tpu.vector_store %arg4[%c0_3, %c0_4], %3 {strides = array<i32>} : memref<8x256xf32, #tpu.memory_space<vmem>>, vector<8x256xf32>,
    return
  }
  func.func @transform_0(%arg0: i32, %arg1: i32) -> (i32, i32) {
    %c0_i32 = arith.constant 0 : i32
    return %arg1, %arg0 : i32, i32
  }
  func.func @transform_1(%arg0: i32, %arg1: i32) -> (i32, i32) {
    %c0_i32 = arith.constant 0 : i32
    %c0_i32_0 = arith.constant 0 : i32
    return %c0_i32, %arg0 : i32, i32
  }
  func.func @transform_2(%arg0: i32, %arg1: i32) -> (i32, i32) {
    %c0_i32 = arith.constant 0 : i32
    return %arg1, %arg0 : i32, i32
  }
}

</mosaic_0001>

<llo_original>
// kernel: tpu_custom_call.1
$region0: #{tpu_custom_call.1}
  #allocation0 [shape = 'u32[]', space=smem, size = 0x4, offset = 0x4, fixed_abs, tag = 'smem constant byte address 0x4 - core index']
  #allocation1 [shape = 'u32[144,128]{1,0:T(1,128)}', space=vmem, size = 0x12000, scoped, tag = 'internal scratch']
  %s0 = inlined_call_operand.hbm [shape: f32[2,256], index: 0, kind: input, shape index: {}]
  %s1 = inlined_call_operand.hbm [shape: f32[1,256], index: 1, kind: input, shape index: {}]
  %s2 = inlined_call_operand.hbm [shape: f32[2,256], index: 2, kind: output, shape index: {}]
  %s3 = sld [smem:[#allocation0]]
  $region26: #{tpu_custom_call.1} parent=0
    _
  %s5 = ssub.s32 1, %s3
  %s6 = scalar_select 0, %s5, %s3
  $region1: #{tpu_custom_call.1} parent=0
    #allocation2 [shape = 'u8[8192]{0}', space=vmem, size = 0x2000, scoped, tag = 'input window, operand 0, single buffered']
    #allocation3 [shape = 's32[1]{0}', space=sflag, size = 0x4, scoped, tag = 'scoped memory for tpu_custom_call.1']
    #allocation4 [shape = 's32[1]{0}', space=sflag, size = 0x4, scoped, tag = 'scoped memory for tpu_custom_call.1']
    #allocation5 [shape = 'u8[1024]{0}', space=vmem, size = 0x400, scoped, tag = 'input window, operand 1, single buffered']
    #allocation6 [shape = 's32[1]{0}', space=sflag, size = 0x4, scoped, tag = 'scoped memory for tpu_custom_call.1']
    #allocation7 [shape = 'u8[8192]{0}', space=vmem, size = 0x2000, scoped, tag = 'output window, operand 0, single buffered']
    %7 = vsyncpa [#allocation3], 0
    %8 = vsyncpa [#allocation6], 0
    %9 = vsyncpa [#allocation4], 0
    // Predicated region
    $region2: #{tpu_custom_call.1} parent=1 // pred_check
      _
    $region3: #{tpu_custom_call.1} parent=1 // pred_check_branch
      %11 = sbr.rel (0) target = $region5
    $region4: #{tpu_custom_call.1} parent=1 // pred_region
      %s13 = ssub.s32 256, 64
      %14 = vsyncadd [#allocation3], %s13
      %s15 = sshll.u32 [#allocation2], 4
      %s16 = int_to_ptr.vmem [resolvable:$true] %s15
      %21 = dma.hbm_to_vmem [thread:$0]  %s0, 64, %s16, [#allocation3], 64, 64, 4
    $region5: #{tpu_custom_call.1} parent=1 // pred_fallthru
      _
    // Predicated region
    $region6: #{tpu_custom_call.1} parent=1 // pred_check
      _
    $region7: #{tpu_custom_call.1} parent=1 // pred_check_branch
      %23 = sbr.rel (0) target = $region9
    $region8: #{tpu_custom_call.1} parent=1 // pred_region
      %s25 = ssub.s32 32, 32
      %26 = vsyncadd [#allocation6], %s25
      %s28 = sshll.u32 [#allocation5], 4
      %s29 = int_to_ptr.vmem [resolvable:$true] %s28
      %31 = dma.hbm_to_vmem [thread:$0]  %s1, 32, %s29, [#allocation6]
    $region9: #{tpu_custom_call.1} parent=1 // pred_fallthru
      _
    // Predicated region
    $region10: #{tpu_custom_call.1} parent=1 // pred_check
      _
    $region11: #{tpu_custom_call.1} parent=1 // pred_check_branch
      %33 = sbr.rel (0) target = $region13
    $region12: #{tpu_custom_call.1} parent=1 // pred_region
      %34 = dma.done [#allocation3], 256
    $region13: #{tpu_custom_call.1} parent=1 // pred_fallthru
      _
    // Predicated region
    $region14: #{tpu_custom_call.1} parent=1 // pred_check
      _
    $region15: #{tpu_custom_call.1} parent=1 // pred_check_branch
      %36 = sbr.rel (0) target = $region17
    $region16: #{tpu_custom_call.1} parent=1 // pred_region
      %37 = dma.done [#allocation6], 32
    $region17: #{tpu_custom_call.1} parent=1 // pred_fallthru
      _
    %v38 = vld [vmem:[#allocation2] sm:$0xf]
    %v39 = vld [vmem:[#allocation2 + $0x4] sm:$0xf]
    %v40 = vld [vmem:[#allocation2 + $0x8] sm:$0xf]
    %v41 = vld [vmem:[#allocation2 + $0xc] sm:$0xf]
    %v42 = vld [vmem:[#allocation5] sm:$0x3]
    %v44 = vlaneseq
    %v45 = vshrl.u32 %v44, 7
    %v46 = vsub.s32 0, %v45
    %v47 = vrot.slane %v42, %v46
    %v48 = vlaneseq
    %v49 = vshrl.u32 %v48, 7
    %v50 = vsub.s32 1, %v49
    %v51 = vrot.slane %v42, %v50
    %v52 = vcombine.low %v47, %v51
    %v53 = vcombine.high %v47, %v51
    %v55 = vunpack.c.l.s4 1983009808
    %v56 = vunpack.c.0.s8 %v55
    %v57 = vlaneseq
    %v58 = vshrl.u32 %v57, 7
    %v59 = vsub.s32 %v56, %v58
    %v60 = vrot.slane %v52, %v59
    %v62 = vunpack.c.l.s4 1983009808
    %v63 = vunpack.c.0.s8 %v62
    %v64 = vlaneseq
    %v65 = vshrl.u32 %v64, 7
    %v66 = vsub.s32 %v63, %v65
    %v67 = vrot.slane %v53, %v66
    %v68 = vcombine.high %v60, %v60
    %v69 = vcombine.high %v67, %v67
    %v74 = vadd.f32 %v38, %v60
    %v75 = vadd.f32 %v39, %v68
    %v76 = vadd.f32 %v40, %v67
    %v77 = vadd.f32 %v41, %v69
    %78 = vst [vmem:[#allocation7] sm:$0xf] %v74
    %79 = vst [vmem:[#allocation7 + $0x4] sm:$0xf] %v75
    %80 = vst [vmem:[#allocation7 + $0x8] sm:$0xf] %v76
    %81 = vst [vmem:[#allocation7 + $0xc] sm:$0xf] %v77
    // Predicated region
    $region18: #{tpu_custom_call.1} parent=1 // pred_check
      _
    $region19: #{tpu_custom_call.1} parent=1 // pred_check_branch
      %83 = sbr.rel (0) target = $region21
    $region20: #{tpu_custom_call.1} parent=1 // pred_region
      %s85 = ssub.s32 256, 64
      %86 = vsyncadd [#allocation4], %s85
      %s87 = sshll.u32 [#allocation7], 4
      %s88 = int_to_ptr.vmem [resolvable:$true] %s87
      %93 = dma.vmem_to_hbm [thread:$0]  %s88, 64, %s2, [#allocation4], 64, 64, 4
    $region21: #{tpu_custom_call.1} parent=1 // pred_fallthru
      _
    // Predicated region
    $region22: #{tpu_custom_call.1} parent=1 // pred_check
      _
    $region23: #{tpu_custom_call.1} parent=1 // pred_check_branch
      %95 = sbr.rel (0) target = $region25
    $region24: #{tpu_custom_call.1} parent=1 // pred_region
      %96 = dma.done [#allocation4], 256
    $region25: #{tpu_custom_call.1} parent=1 // pred_fallthru
      _
    %97 = vsyncpa [#allocation3], 1
    %98 = vsyncpa [#allocation6], 1
    %99 = vsyncpa [#allocation4], 1

</llo_original>
